<compile_context>
chip_gen: v6e
topology: v6e:2x2x1
jax: 0.10.0
libtpu: 0.0.40
codegen_flags: <defaults>
</compile_context>

<pallas_src>
import functools

import jax
import jax.numpy as jnp
from jax.experimental import pallas as pl
from jax.experimental.pallas import tpu as pltpu


def _round_up(x, m):
    return ((x + m - 1) // m) * m


def _vmem_limit_bytes():
    """Per-generation scoped-VMEM limit: ~3/4 of physical, capped at 96 MiB.

    v5e/v6e (128 MiB) -> 96 MiB, v7x (64 MiB) -> 48 MiB, unknown -> previous 32 MiB.
    """
    try:
        cap = int(pltpu.get_tpu_info().vmem_capacity_bytes)
        return min(cap * 3 // 4, 96 * 1024 * 1024)
    except Exception:
        return 32 * 1024 * 1024


def _malconv_window_kernel(x_ref, wc_ref, bc_ref, pmax_ref, *,
                           n_valid, tw, wb_per_split, channels, masked):
    """One grid step: gated conv over `tw` windows folded into the running max."""
    b, _, we = x_ref.shape

    # (B, Tw, WE) -> (B*Tw, WE); Tw is a multiple of 16 so the collapse is layout-free.
    x = x_ref[...].reshape(b * tw, we)

    # Fused conv_1/conv_2: one bf16 (B*Tw, WE) x (WE, 2C) MXU pass, f32 accumulation.
    z = jnp.dot(x, wc_ref[...], preferred_element_type=jnp.float32) + bc_ref[...]
    gated = z[:, :channels] * jax.nn.sigmoid(z[:, channels:])        # (B*Tw, C) f32
    gated = gated.reshape(b, tw, channels)

    if masked:
        # Mask windows that only exist because N was padded up to the tile size.
        # Narrow (1, Tw, 1) iota broadcast inside the select (no (B, Tw, C) int32 temp);
        # this branch is only emitted when the padded window count != N.
        start = (pl.program_id(0) * wb_per_split + pl.program_id(1)) * tw
        widx = jax.lax.broadcasted_iota(jnp.int32, (1, tw, 1), 1) + start
        gated = jnp.where(widx < n_valid, gated, -jnp.inf)

    gmax = jnp.max(gated, axis=1)                                     # (B, C)

    @pl.when(pl.program_id(1) == 0)
    def _():
        pmax_ref[...] = jnp.full(pmax_ref.shape, -jnp.inf, dtype=pmax_ref.dtype)

    # Running AdaptiveMaxPool1d(1), accumulated in the resident (1, B, C) output block.
    pmax_ref[...] = jnp.maximum(pmax_ref[...], gmax[None])


def malconv_forward(tokens, params, *, window_size, tw_target=None, num_splits=1):
    embd = params["embd"]
    w1, b1 = params["w_conv1"], params["b_conv1"]
    w2, b2 = params["w_conv2"], params["b_conv2"]
    wf1, bf1 = params["w_fc1"], params["b_fc1"]
    wf2, bf2 = params["w_fc2"], params["b_fc2"]

    B, L = tokens.shape
    C, E, W = w1.shape
    assert W == window_size
    N = L // W                       # conv output length (stride == kernel); truncates L
    assert N >= 1, "sequence shorter than one window"
    WE, C2 = W * E, 2 * C

    # ---- generation-aware VMEM budgeting (count f32 intermediates, not just the x stream) ----
    vmem_limit = _vmem_limit_bytes()
    fixed = 2 * (WE * C2 * 2 + C2 * 4)             # double-buffered fused conv weights + bias
    per_win = B * (2 * WE * 2                      # bf16 x block, double-buffered
                   + WE * 2                        # in-kernel (B*Tw, WE) flatten copy
                   + (2 * C2 + 2 * C) * 4)         # f32 z / sigmoid / gated temps
    budget = max(per_win * 16, int(vmem_limit * 0.6) - fixed)
    tw_cap = max(16, (budget // per_win) // 16 * 16)

    # ---- window tile Tw: biggest (multiple of 16) that fits the budget, then rebalanced
    # across the window-blocks of each split to minimize padding. ----
    win_per_split = pl.cdiv(N, num_splits)
    tw = min(tw_cap, _round_up(win_per_split, 16))
    if tw_target is not None:
        tw = min(tw, max(16, _round_up(tw_target, 16)))
    tw = max(16, tw)
    wb_per_split = pl.cdiv(win_per_split, tw)                       # window-blocks per split
    tw = _round_up(pl.cdiv(win_per_split, wb_per_split), 16)        # rebalance to cut padding
    n_pad = num_splits * wb_per_split * tw                          # padded window count

    # ---- plain-JAX glue: embedding gather in bf16, natural (B, N, W*E) layout ----
    # TODO(synk): gathering in-kernel from a VMEM-resident 257xE table would cut the dominant
    # HBM stream ~9x, but Mosaic has no efficient table-lookup gather for a 257-row operand
    # (lane/sublane dynamic-gather is vreg-sized) and a one-hot MXU gather costs ~vocab/E more
    # matmul time than the conv itself, so the gather stays as an XLA op in the wrapper.
    tokens = tokens[:, :N * W]
    pad = (n_pad - N) * W
    if pad:
        tokens = jnp.pad(tokens, ((0, 0), (0, pad)))                # token 0 == padding_idx
    x = embd.astype(jnp.bfloat16)[tokens]                           # (B, n_pad*W, E) bf16
    x = x.reshape(B, n_pad, WE)                                     # free reshape, no transpose

    # Conv weights (C, E, W) -> fused (W*E, 2C) matmul operand matching the k*E+e flatten.
    wc = jnp.concatenate(
        [jnp.transpose(w1, (2, 1, 0)).reshape(WE, C),
         jnp.transpose(w2, (2, 1, 0)).reshape(WE, C)], axis=1).astype(jnp.bfloat16)
    bc = jnp.concatenate([b1, b2]).reshape(1, C2).astype(jnp.float32)

    kernel = functools.partial(
        _malconv_window_kernel, n_valid=N, tw=tw, wb_per_split=wb_per_split,
        channels=C, masked=(n_pad != N))

    # NOTE: wc/bc are grid-invariant (constant index_map) so they are only DMA'd once; the
    # default double-buffer wastes one extra wc copy of VMEM (pl.Buffered(1) would reclaim
    # it but is left at the default for lowering safety).
    partial_max = pl.pallas_call(
        kernel,
        out_shape=jax.ShapeDtypeStruct((num_splits, B, C), jnp.float32),
        grid_spec=pltpu.PrefetchScalarGridSpec(
            num_scalar_prefetch=0,
            grid=(num_splits, wb_per_split),
            in_specs=[
                pl.BlockSpec((B, tw, WE), lambda p, w: (0, p * wb_per_split + w, 0)),
                pl.BlockSpec((WE, C2), lambda p, w: (0, 0)),        # fused conv weights
                pl.BlockSpec((1, C2), lambda p, w: (0, 0)),         # fused conv bias
            ],
            out_specs=pl.BlockSpec((1, B, C), lambda p, w: (p, 0, 0)),
        ),
        compiler_params=pltpu.CompilerParams(
            dimension_semantics=("parallel", "arbitrary"),
            vmem_limit_bytes=vmem_limit,
        ),
    )(x, wc, bc)

    # Head (review: no second pallas_call): combine the per-split maxes and run
    # fc_1 -> relu -> fc_2 on the tiny (B, C) tensor in plain JAX.
    pooled = jnp.max(partial_max, axis=0)                            # AdaptiveMaxPool1d(1) + view
    h = jnp.maximum(pooled @ wf1.T + bf1, 0.0)                       # relu(fc_1)
    return h @ wf2.T + bf2                                           # fc_2


def malconv_reference(tokens, params):
    """Pure-JAX f32 reference matching the PyTorch forward."""
    embd = params["embd"]
    w1, b1 = params["w_conv1"], params["b_conv1"]
    w2, b2 = params["w_conv2"], params["b_conv2"]
    wf1, bf1 = params["w_fc1"], params["b_fc1"]
    wf2, bf2 = params["w_fc2"], params["b_fc2"]
    B, L = tokens.shape
    C, E, W = w1.shape
    N = L // W
    emb = embd[tokens][:, :N * W].reshape(B, N, W, E)
    c1 = jnp.einsum("bnwe,cew->bnc", emb, w1) + b1
    c2 = jnp.einsum("bnwe,cew->bnc", emb, w2) + b2
    gated = c1 * jax.nn.sigmoid(c2)
    pooled = jnp.max(gated, axis=1)                 # AdaptiveMaxPool1d(1) + view
    h = jnp.maximum(pooled @ wf1.T + bf1, 0.0)
    return h @ wf2.T + bf2


def init_params(key, out_size, channels, window_size, embd_size):
    ks = jax.random.split(key, 9)

    def nrm(k, shape, scale=0.05):
        return scale * jax.random.normal(k, shape, dtype=jnp.float32)

    embd = nrm(ks[0], (257, embd_size))
    embd = embd.at[0].set(0.0)                      # padding_idx=0
    return dict(
        embd=embd,
        w_conv1=nrm(ks[1], (channels, embd_size, window_size)),
        b_conv1=nrm(ks[2], (channels,)),
        w_conv2=nrm(ks[3], (channels, embd_size, window_size)),
        b_conv2=nrm(ks[4], (channels,)),
        w_fc1=nrm(ks[5], (channels, channels)),
        b_fc1=nrm(ks[6], (channels,)),
        w_fc2=nrm(ks[7], (out_size, channels)),
        b_fc2=nrm(ks[8], (out_size,)),
    )


if __name__ == "__main__":
    # Small shapes consistent with MalConv: bytes (B, L) -> logits (B, out_size).
    out_size, channels, window_size, embd_size = 2, 128, 16, 8
    B, L = 2, 1600                                   # 100 non-overlapping conv windows

    key = jax.random.PRNGKey(0)
    pkey, tkey = jax.random.split(key)
    params = init_params(pkey, out_size, channels, window_size, embd_size)
    tokens = jax.random.randint(tkey, (B, L), 0, 257, dtype=jnp.int32)

    ref = malconv_reference(tokens, params)

    # Default: single split (single-TC v5e/v6e), one VMEM-budget-sized block per step.
    fwd_default = jax.jit(functools.partial(malconv_forward, window_size=window_size))
    # Small tile + 2 splits: exercises the multi-step reduction, the window-padding mask
    # path, and the v7x-style cross-TensorCore split.
    fwd_small = jax.jit(functools.partial(
        malconv_forward, window_size=window_size, tw_target=32, num_splits=2))

    out = jax.block_until_ready(fwd_default(tokens, params))
    out2 = jax.block_until_ready(fwd_small(tokens, params))

    assert out.shape == (B, out_size)
    # bf16 activation/conv-weight stream (f32 accumulation) -> loosened tolerance vs f32 ref.
    assert jnp.allclose(out, ref, atol=3e-3, rtol=3e-2), (out, ref)
    assert jnp.allclose(out2, ref, atol=3e-3, rtol=3e-2), (out2, ref)
    print("KERNEL_OK")
</pallas_src>

<mosaic_0001>
module attributes {stable_mosaic.version = 11 : i64} {
  func.func @_malconv_window_kernel(%arg0: i32, %arg1: i32, %arg2: memref<2x112x128xbf16, #tpu.memory_space<vmem>>, %arg3: memref<128x256xbf16, #tpu.memory_space<vmem>>, %arg4: memref<1x256xf32, #tpu.memory_space<vmem>>, %arg5: memref<1x2x128xf32, #tpu.memory_space<vmem>>) attributes {dimension_semantics = [#tpu.dimension_semantics<parallel>, #tpu.dimension_semantics<arbitrary>], iteration_bounds = array<i64: 1, 1>, scalar_prefetch = 0 : i64, scratch_operands = 0 : i64, tpu.core_type = #tpu.core_type<tc>, window_params = [{transform_indices = @transform_0, window_bounds = array<i64: 2, 112, 128>}, {pipeline_mode = #tpu.pipeline_mode<synchronous>, transform_indices = @transform_1, window_bounds = array<i64: 128, 256>}, {pipeline_mode = #tpu.pipeline_mode<synchronous>, transform_indices = @transform_2, window_bounds = array<i64: 1, 256>}, {transform_indices = @transform_3, window_bounds = array<i64: 1, 2, 128>}]} {
    %c0 = arith.constant 0 : index
    %c0_0 = arith.constant 0 : index
    %c0_1 = arith.constant 0 : index
    %0 = vector.load %arg2[%c0, %c0_0, %c0_1] : memref<2x112x128xbf16, #tpu.memory_space<vmem>>, vector<2x112x128xbf16>
    %1 = vector.shape_cast %0 : vector<2x112x128xbf16> to vector<224x128xbf16>
    %c0_2 = arith.constant 0 : index
    %c0_3 = arith.constant 0 : index
    %2 = vector.load %arg3[%c0_2, %c0_3] : memref<128x256xbf16, #tpu.memory_space<vmem>>, vector<128x256xbf16>
    %cst = arith.constant dense<0.000000e+00> : vector<224x256xf32>
    %3 = tpu.matmul %1, %2, %cst {dimension_numbers = #tpu.dot_dimension_numbers<[1], [0], [0], [1], [0, 0, 1, 1], [], []>} : vector<224x128xbf16>, vector<128x256xbf16>, vector<224x256xf32> -> vector<224x256xf32>
    %c0_4 = arith.constant 0 : index
    %c0_5 = arith.constant 0 : index
    %4 = vector.load %arg4[%c0_4, %c0_5] : memref<1x256xf32, #tpu.memory_space<vmem>>, vector<1x256xf32>
    %5 = vector.broadcast %4 : vector<1x256xf32> to vector<224x256xf32>
    %6 = arith.addf %3, %5 : vector<224x256xf32>
    %7 = vector.extract_strided_slice %6 {offsets = [0, 0], sizes = [224, 128], strides = [1, 1]} : vector<224x256xf32> to vector<224x128xf32>
    %8 = vector.extract_strided_slice %6 {offsets = [0, 128], sizes = [224, 128], strides = [1, 1]} : vector<224x256xf32> to vector<224x128xf32>
    %9 = arith.negf %8 : vector<224x128xf32>
    %10 = math.exp %9 : vector<224x128xf32>
    %cst_6 = arith.constant 1.000000e+00 : f32
    %11 = vector.broadcast %cst_6 : f32 to vector<224x128xf32>
    %12 = arith.addf %11, %10 : vector<224x128xf32>
    %13 = arith.divf %11, %12 : vector<224x128xf32>
    %14 = arith.mulf %7, %13 : vector<224x128xf32>
    %15 = vector.shape_cast %14 : vector<224x128xf32> to vector<2x112x128xf32>
    %c1_i32 = arith.constant 1 : i32
    %16 = arith.muli %arg0, %c1_i32 : i32
    %17 = arith.addi %16, %arg1 : i32
    %c112_i32 = arith.constant 112 : i32
    %18 = arith.muli %17, %c112_i32 : i32
    %19 = tpu.iota {dimensions = array<i32: 1>} : vector<1x112x1xi32>
    %20 = vector.broadcast %18 : i32 to vector<1x112x1xi32>
    %21 = arith.addi %19, %20 : vector<1x112x1xi32>
    %c100_i32 = arith.constant 100 : i32
    %22 = vector.broadcast %c100_i32 : i32 to vector<1x112x1xi32>
    %23 = arith.cmpi slt, %21, %22 : vector<1x112x1xi32>
    %cst_7 = arith.constant 0xFF800000 : f32
    %24 = vector.shape_cast %23 : vector<1x112x1xi1> to vector<1x112x1xi1>
    %25 = vector.broadcast %24 : vector<1x112x1xi1> to vector<2x112x128xi1>
    %26 = vector.broadcast %cst_7 : f32 to vector<2x112x128xf32>
    %27 = arith.select %25, %15, %26 : vector<2x112x128xi1>, vector<2x112x128xf32>
    %cst_8 = arith.constant dense<0xFF800000> : vector<2x128xf32>
    %28 = vector.multi_reduction <maximumf>, %27, %cst_8 [1] : vector<2x112x128xf32> to vector<2x128xf32>
    %c0_i32 = arith.constant 0 : i32
    %29 = arith.cmpi eq, %arg1, %c0_i32 : i32
    %30 = arith.extui %29 : i1 to i32
    %c0_i32_9 = arith.constant 0 : i32
    %31 = arith.cmpi ne, %30, %c0_i32_9 : i32
    scf.if %31 {
      %cst_16 = arith.constant 0xFF800000 : f32
      %36 = vector.broadcast %cst_16 : f32 to vector<1x2x128xf32>
      %c0_17 = arith.constant 0 : index
      %c0_18 = arith.constant 0 : index
      %c0_19 = arith.constant 0 : index
      %37 = vector.load %arg5[%c0_17, %c0_18, %c0_19] : memref<1x2x128xf32, #tpu.memory_space<vmem>>, vector<1x2x128xf32>
      tpu.vector_store %arg5[%c0_17, %c0_18, %c0_19], %36 {strides = array<i32>} : memref<1x2x128xf32, #tpu.memory_space<vmem>>, vector<1x2x128xf32>,
    } else {
    }
    %c0_10 = arith.constant 0 : index
    %c0_11 = arith.constant 0 : index
    %c0_12 = arith.constant 0 : index
    %32 = vector.load %arg5[%c0_10, %c0_11, %c0_12] : memref<1x2x128xf32, #tpu.memory_space<vmem>>, vector<1x2x128xf32>
    %33 = vector.shape_cast %28 : vector<2x128xf32> to vector<1x2x128xf32>
    %34 = arith.maximumf %32, %33 : vector<1x2x128xf32>
    %c0_13 = arith.constant 0 : index
    %c0_14 = arith.constant 0 : index
    %c0_15 = arith.constant 0 : index
    %35 = vector.load %arg5[%c0_13, %c0_14, %c0_15] : memref<1x2x128xf32, #tpu.memory_space<vmem>>, vector<1x2x128xf32>
    tpu.vector_store %arg5[%c0_13, %c0_14, %c0_15], %34 {strides = array<i32>} : memref<1x2x128xf32, #tpu.memory_space<vmem>>, vector<1x2x128xf32>,
    return
  }
  func.func @transform_0(%arg0: i32, %arg1: i32) -> (i32, i32, i32) {
    %c1_i32 = arith.constant 1 : i32
    %0 = arith.muli %arg0, %c1_i32 : i32
    %1 = arith.addi %0, %arg1 : i32
    %c0_i32 = arith.constant 0 : i32
    %c0_i32_0 = arith.constant 0 : i32
    %c0_i32_1 = arith.constant 0 : i32
    return %c0_i32, %1, %c0_i32_0 : i32, i32, i32
  }
  func.func @transform_1(%arg0: i32, %arg1: i32) -> (i32, i32) {
    %c0_i32 = arith.constant 0 : i32
    %c0_i32_0 = arith.constant 0 : i32
    %c0_i32_1 = arith.constant 0 : i32
    return %c0_i32, %c0_i32_0 : i32, i32
  }
  func.func @transform_2(%arg0: i32, %arg1: i32) -> (i32, i32) {
    %c0_i32 = arith.constant 0 : i32
    %c0_i32_0 = arith.constant 0 : i32
    %c0_i32_1 = arith.constant 0 : i32
    return %c0_i32, %c0_i32_0 : i32, i32
  }
  func.func @transform_3(%arg0: i32, %arg1: i32) -> (i32, i32, i32) {
    %c0_i32 = arith.constant 0 : i32
    %c0_i32_0 = arith.constant 0 : i32
    %c0_i32_1 = arith.constant 0 : i32
    return %arg0, %c0_i32, %c0_i32_0 : i32, i32, i32
  }
}

</mosaic_0001>

<llo_original>
// kernel: malconv_forward.1
$region0: #{malconv_forward.1}
  #allocation0 [shape = 'u32[]', space=smem, size = 0x4, offset = 0x4, fixed_abs, tag = 'smem constant byte address 0x4 - core index']
  #allocation1 [shape = 'u32[144,128]{1,0:T(1,128)}', space=vmem, size = 0x12000, scoped, tag = 'internal scratch']
  %s0 = inlined_call_operand.vmem [shape: bf16[2,112,128], index: 0, kind: input, shape index: {}]
  %s1 = inlined_call_operand.vmem [shape: bf16[128,256], index: 1, kind: input, shape index: {}]
  %s2 = inlined_call_operand.vmem [shape: f32[1,256], index: 2, kind: input, shape index: {}]
  %s3 = inlined_call_operand.vmem [shape: f32[1,2,128], index: 3, kind: output, shape index: {}]
  %s4 = sld [smem:[#allocation0]]
  $region26: #{malconv_forward.1} parent=0
    _
  %s6 = ssub.s32 1, %s4
  %s7 = scalar_select 0, %s6, %s4
  // Predicated region
  $region2: #{malconv_forward.1} parent=0 // pred_check
    _
  $region3: #{malconv_forward.1} parent=0 // pred_check_branch
    %9 = sbr.rel (0) target = $region5
  $region4: #{malconv_forward.1} parent=0 // pred_region
    %s10 = sadd.s32 0, 0
    %s11 = smul.u32 14, %s10
    %p12 = scmp.lt.s32.totalorder %s11, 13
    %s13 = scalar_select %p12, %s11, 13
    %s14 = smul.addr %s13, 4
    %s15 = scalar_lea.vmem %s0, %s14
    %s16 = sadd.s32 0, 0
    %s17 = smul.u32 14, %s16
  $region5: #{malconv_forward.1} parent=0 // pred_fallthru
    _
  // Predicated region
  $region6: #{malconv_forward.1} parent=0 // pred_check
    _
  $region7: #{malconv_forward.1} parent=0 // pred_check_branch
    %19 = sbr.rel (0) target = $region9
  $region8: #{malconv_forward.1} parent=0 // pred_region
    _
  $region9: #{malconv_forward.1} parent=0 // pred_fallthru
    _
  // Predicated region
  $region10: #{malconv_forward.1} parent=0 // pred_check
    _
  $region11: #{malconv_forward.1} parent=0 // pred_check_branch
    %21 = sbr.rel (0) target = $region13
  $region12: #{malconv_forward.1} parent=0 // pred_region
    _
  $region13: #{malconv_forward.1} parent=0 // pred_fallthru
    _
  %s22 = sadd.s32 0, 0
  %s23 = smul.u32 14, %s22
  %p24 = scmp.lt.s32.totalorder %s23, 13
  %s25 = scalar_select %p24, %s23, 13
  %s26 = smul.addr %s25, 4
  %s27 = scalar_lea.vmem %s0, %s26
  %s28 = sadd.s32 0, 0
  %s29 = smul.u32 14, %s28
  %p30 = scmp.lt.s32.totalorder %s29, 13
  %s31 = scalar_select %p30, %s29, 13
  %s32 = smul.addr %s31, 4
  %s33 = scalar_lea.vmem %s0, %s32
  %s34 = sadd.s32 0, 0
  %s35 = smul.u32 14, %s34
  %v37 = vld [vmem:[%s33] sm:$0xf]
  %v38 = vld [vmem:[%s33 + $0x4] sm:$0xf]
  %v39 = vld [vmem:[%s33 + $0x8] sm:$0xf]
  %v40 = vld [vmem:[%s33 + $0xc] sm:$0xf]
  %v41 = vld [vmem:[%s33 + $0x10] sm:$0xf]
  %v42 = vld [vmem:[%s33 + $0x14] sm:$0xf]
  %v43 = vld [vmem:[%s33 + $0x18] sm:$0xf]
  %v44 = vld [vmem:[%s33 + $0x1c] sm:$0xf]
  %v45 = vld [vmem:[%s33 + $0x20] sm:$0xf]
  %v46 = vld [vmem:[%s33 + $0x24] sm:$0xf]
  %v47 = vld [vmem:[%s33 + $0x28] sm:$0xf]
  %v48 = vld [vmem:[%s33 + $0x2c] sm:$0xf]
  %v49 = vld [vmem:[%s33 + $0x30] sm:$0xf]
  %v50 = vld [vmem:[%s33 + $0x34] sm:$0xf]
  %v51 = vld [vmem:[%s33 + $0x38] sm:$0xf]
  %v52 = vld [vmem:[%s33 + $0x3c] sm:$0xf]
  %v53 = vld [vmem:[%s33 + $0x40] sm:$0xf]
  %v54 = vld [vmem:[%s33 + $0x44] sm:$0xf]
  %v55 = vld [vmem:[%s33 + $0x48] sm:$0xf]
  %v56 = vld [vmem:[%s33 + $0x4c] sm:$0xf]
  %v57 = vld [vmem:[%s33 + $0x50] sm:$0xf]
  %v58 = vld [vmem:[%s33 + $0x54] sm:$0xf]
  %v59 = vld [vmem:[%s33 + $0x58] sm:$0xf]
  %v60 = vld [vmem:[%s33 + $0x5c] sm:$0xf]
  %v61 = vld [vmem:[%s33 + $0x60] sm:$0xf]
  %v62 = vld [vmem:[%s33 + $0x64] sm:$0xf]
  %v63 = vld [vmem:[%s33 + $0x68] sm:$0xf]
  %v64 = vld [vmem:[%s33 + $0x6c] sm:$0xf]
  %v65 = vld [vmem:[%s1] sm:$0xff]
  %v66 = vld [vmem:[%s1 + $0x8] sm:$0xff]
  %v67 = vld [vmem:[%s1 + $0x10] sm:$0xff]
  %v68 = vld [vmem:[%s1 + $0x18] sm:$0xff]
  %v69 = vld [vmem:[%s1 + $0x20] sm:$0xff]
  %v70 = vld [vmem:[%s1 + $0x28] sm:$0xff]
  %v71 = vld [vmem:[%s1 + $0x30] sm:$0xff]
  %v72 = vld [vmem:[%s1 + $0x38] sm:$0xff]
  %v73 = vld [vmem:[%s1 + $0x40] sm:$0xff]
  %v74 = vld [vmem:[%s1 + $0x48] sm:$0xff]
  %v75 = vld [vmem:[%s1 + $0x50] sm:$0xff]
  %v76 = vld [vmem:[%s1 + $0x58] sm:$0xff]
  %v77 = vld [vmem:[%s1 + $0x60] sm:$0xff]
  %v78 = vld [vmem:[%s1 + $0x68] sm:$0xff]
  %v79 = vld [vmem:[%s1 + $0x70] sm:$0xff]
  %v80 = vld [vmem:[%s1 + $0x78] sm:$0xff]
  %v81 = vld [vmem:[%s2] sm:$0x3]
  %v83 = vlaneseq
  %v84 = vshrl.u32 %v83, 7
  %v85 = vsub.s32 0, %v84
  %v86 = vrot.slane %v81, %v85
  %v87 = vlaneseq
  %v88 = vshrl.u32 %v87, 7
  %v89 = vsub.s32 1, %v88
  %v90 = vrot.slane %v81, %v89
  %v121 = vunpack.c.l.b16 %v37
  %v122 = vunpack.c.l.b16 %v38
  %v123 = vunpack.c.l.b16 %v39
  %v124 = vunpack.c.l.b16 %v40
  %v125 = vunpack.c.l.b16 %v41
  %v126 = vunpack.c.l.b16 %v42
  %v127 = vunpack.c.l.b16 %v43
  %v128 = vunpack.c.l.b16 %v44
  %v129 = vunpack.c.l.b16 %v45
  %v130 = vunpack.c.l.b16 %v46
  %v131 = vunpack.c.l.b16 %v47
  %v132 = vunpack.c.l.b16 %v48
  %v133 = vunpack.c.l.b16 %v49
  %v134 = vunpack.c.l.b16 %v50
  %v135 = vunpack.c.l.b16 %v51
  %v136 = vunpack.c.l.b16 %v52
  %v137 = vunpack.c.l.b16 %v53
  %v138 = vunpack.c.l.b16 %v54
  %v139 = vunpack.c.l.b16 %v55
  %v140 = vunpack.c.l.b16 %v56
  %v141 = vunpack.c.l.b16 %v57
  %v142 = vunpack.c.l.b16 %v58
  %v143 = vunpack.c.l.b16 %v59
  %v144 = vunpack.c.l.b16 %v60
  %v145 = vunpack.c.l.b16 %v61
  %v146 = vunpack.c.l.b16 %v62
  %v147 = vunpack.c.l.b16 %v63
  %v148 = vunpack.c.l.b16 %v64
  %v149 = vpack.c.b16 %v122, %v121
  %v150 = vpack.c.b16 %v124, %v123
  %v151 = vpack.c.b16 %v126, %v125
  %v152 = vpack.c.b16 %v128, %v127
  %v153 = vpack.c.b16 %v130, %v129
  %v154 = vpack.c.b16 %v132, %v131
  %v155 = vpack.c.b16 %v134, %v133
  %v156 = vpack.c.b16 %v136, %v135
  %v157 = vpack.c.b16 %v138, %v137
  %v158 = vpack.c.b16 %v140, %v139
  %v159 = vpack.c.b16 %v142, %v141
  %v160 = vpack.c.b16 %v144, %v143
  %v161 = vpack.c.b16 %v146, %v145
  %v162 = vpack.c.b16 %v148, %v147
  %v193 = vunpack.c.l.b16 %v65
  %v194 = vunpack.c.h.b16 %v65
  %v195 = vunpack.c.l.b16 %v66
  %v196 = vunpack.c.h.b16 %v66
  %v197 = vunpack.c.l.b16 %v67
  %v198 = vunpack.c.h.b16 %v67
  %v199 = vunpack.c.l.b16 %v68
  %v200 = vunpack.c.h.b16 %v68
  %v201 = vunpack.c.l.b16 %v69
  %v202 = vunpack.c.h.b16 %v69
  %v203 = vunpack.c.l.b16 %v70
  %v204 = vunpack.c.h.b16 %v70
  %v205 = vunpack.c.l.b16 %v71
  %v206 = vunpack.c.h.b16 %v71
  %v207 = vunpack.c.l.b16 %v72
  %v208 = vunpack.c.h.b16 %v72
  %v209 = vunpack.c.l.b16 %v73
  %v210 = vunpack.c.h.b16 %v73
  %v211 = vunpack.c.l.b16 %v74
  %v212 = vunpack.c.h.b16 %v74
  %v213 = vunpack.c.l.b16 %v75
  %v214 = vunpack.c.h.b16 %v75
  %v215 = vunpack.c.l.b16 %v76
  %v216 = vunpack.c.h.b16 %v76
  %v217 = vunpack.c.l.b16 %v77
  %v218 = vunpack.c.h.b16 %v77
  %v219 = vunpack.c.l.b16 %v78
  %v220 = vunpack.c.h.b16 %v78
  %v221 = vunpack.c.l.b16 %v79
  %v222 = vunpack.c.h.b16 %v79
  %v223 = vunpack.c.l.b16 %v80
  %v224 = vunpack.c.h.b16 %v80
  %v225 = vpack.c.b16 %v195, %v193
  %v226 = vpack.c.b16 %v196, %v194
  %v227 = vpack.c.b16 %v199, %v197
  %v228 = vpack.c.b16 %v200, %v198
  %v229 = vpack.c.b16 %v203, %v201
  %v230 = vpack.c.b16 %v204, %v202
  %v231 = vpack.c.b16 %v207, %v205
  %v232 = vpack.c.b16 %v208, %v206
  %v233 = vpack.c.b16 %v211, %v209
  %v234 = vpack.c.b16 %v212, %v210
  %v235 = vpack.c.b16 %v215, %v213
  %v236 = vpack.c.b16 %v216, %v214
  %v237 = vpack.c.b16 %v219, %v217
  %v238 = vpack.c.b16 %v220, %v218
  %v239 = vpack.c.b16 %v223, %v221
  %v240 = vpack.c.b16 %v224, %v222
  %257 = vmatprep.subr.bf16.mxu0 %v240
  %258 = vmatpush1.bf16.msra.mxu0 %v239
  %259 = vmatprep.subr.bf16.mxu0 %v238
  %260 = vmatpush1.bf16.msra.mxu0 %v237
  %261 = vmatprep.subr.bf16.mxu0 %v236
  %262 = vmatpush1.bf16.msra.mxu0 %v235
  %263 = vmatprep.subr.bf16.mxu0 %v234
  %264 = vmatpush1.bf16.msra.mxu0 %v233
  %265 = vmatprep.subr.bf16.mxu0 %v232
  %266 = vmatpush1.bf16.msra.mxu0 %v231
  %267 = vmatprep.subr.bf16.mxu0 %v230
  %268 = vmatpush1.bf16.msra.mxu0 %v229
  %269 = vmatprep.subr.bf16.mxu0 %v228
  %270 = vmatpush1.bf16.msra.mxu0 %v227
  %271 = vmatprep.subr.bf16.mxu0 %v226
  %272 = vmatpush1.bf16.msra.mxu0 %v225
  %273 = vmatprep.subr.bf16.mxu0 0
  %274 = vmatpush2.bf16.msra.mxu0 0
  %275 = vmatprep.subr.bf16.mxu0 0
  %276 = vmatpush2.bf16.msra.mxu0 0
  %277 = vmatprep.subr.bf16.mxu0 0
  %278 = vmatpush2.bf16.msra.mxu0 0
  %279 = vmatprep.subr.bf16.mxu0 0
  %280 = vmatpush2.bf16.msra.mxu0 0
  %281 = vmatprep.subr.bf16.mxu0 0
  %282 = vmatpush2.bf16.msra.mxu0 0
  %283 = vmatprep.subr.bf16.mxu0 0
  %284 = vmatpush2.bf16.msra.mxu0 0
  %285 = vmatprep.subr.bf16.mxu0 0
  %286 = vmatpush2.bf16.msra.mxu0 0
  %287 = vmatprep.subr.bf16.mxu0 0
  %288 = vmatpush2.bf16.msra.mxu0 0
  %289 = vmatprep.mubr.bf16.mxu0 0
  %290 = vmatmul.mubr.bf16.gmra.mxu0 %v149
  %v291 = vpop.f32.mrf.mxu0
  %v292 = vadd.f32 %v86, %v291
  %v293 = vpop.f32.mrf.mxu0
  %v294 = vadd.f32 %v90, %v293
  %v295 = vpop.f32.mrf.mxu0
  %v296 = vadd.f32 %v86, %v295
  %v297 = vpop.f32.mrf.mxu0
  %v298 = vadd.f32 %v90, %v297
  %299 = vmatprep.mubr.bf16.mxu0 0
  %300 = vmatmul.mubr.bf16.gmra.mxu0 %v150
  %v301 = vpop.f32.mrf.mxu0
  %v302 = vadd.f32 %v86, %v301
  %v303 = vpop.f32.mrf.mxu0
  %v304 = vadd.f32 %v90, %v303
  %v305 = vpop.f32.mrf.mxu0
  %v306 = vadd.f32 %v86, %v305
  %v307 = vpop.f32.mrf.mxu0
  %v308 = vadd.f32 %v90, %v307
  %309 = vmatprep.mubr.bf16.mxu0 0
  %310 = vmatmul.mubr.bf16.gmra.mxu0 %v151
  %v311 = vpop.f32.mrf.mxu0
  %v312 = vadd.f32 %v86, %v311
  %v313 = vpop.f32.mrf.mxu0
  %v314 = vadd.f32 %v90, %v313
  %v315 = vpop.f32.mrf.mxu0
  %v316 = vadd.f32 %v86, %v315
  %v317 = vpop.f32.mrf.mxu0
  %v318 = vadd.f32 %v90, %v317
  %319 = vmatprep.mubr.bf16.mxu0 0
  %320 = vmatmul.mubr.bf16.gmra.mxu0 %v152
  %v321 = vpop.f32.mrf.mxu0
  %v322 = vadd.f32 %v86, %v321
  %v323 = vpop.f32.mrf.mxu0
  %v324 = vadd.f32 %v90, %v323
  %v325 = vpop.f32.mrf.mxu0
  %v326 = vadd.f32 %v86, %v325
  %v327 = vpop.f32.mrf.mxu0
  %v328 = vadd.f32 %v90, %v327
  %329 = vmatprep.mubr.bf16.mxu0 0
  %330 = vmatmul.mubr.bf16.gmra.mxu0 %v153
  %v331 = vpop.f32.mrf.mxu0
  %v332 = vadd.f32 %v86, %v331
  %v333 = vpop.f32.mrf.mxu0
  %v334 = vadd.f32 %v90, %v333
  %v335 = vpop.f32.mrf.mxu0
  %v336 = vadd.f32 %v86, %v335
  %v337 = vpop.f32.mrf.mxu0
  %v338 = vadd.f32 %v90, %v337
  %339 = vmatprep.mubr.bf16.mxu0 0
  %340 = vmatmul.mubr.bf16.gmra.mxu0 %v154
  %v341 = vpop.f32.mrf.mxu0
  %v342 = vadd.f32 %v86, %v341
  %v343 = vpop.f32.mrf.mxu0
  %v344 = vadd.f32 %v90, %v343
  %v345 = vpop.f32.mrf.mxu0
  %v346 = vadd.f32 %v86, %v345
  %v347 = vpop.f32.mrf.mxu0
  %v348 = vadd.f32 %v90, %v347
  %349 = vmatprep.mubr.bf16.mxu0 0
  %350 = vmatmul.mubr.bf16.gmra.mxu0 %v155
  %v351 = vpop.f32.mrf.mxu0
  %v352 = vadd.f32 %v86, %v351
  %v353 = vpop.f32.mrf.mxu0
  %v354 = vadd.f32 %v90, %v353
  %v355 = vpop.f32.mrf.mxu0
  %v356 = vadd.f32 %v86, %v355
  %v357 = vpop.f32.mrf.mxu0
  %v358 = vadd.f32 %v90, %v357
  %359 = vmatprep.mubr.bf16.mxu0 0
  %360 = vmatmul.mubr.bf16.gmra.mxu0 %v156
  %v361 = vpop.f32.mrf.mxu0
  %v362 = vadd.f32 %v86, %v361
  %v363 = vpop.f32.mrf.mxu0
  %v364 = vadd.f32 %v90, %v363
  %v365 = vpop.f32.mrf.mxu0
  %v366 = vadd.f32 %v86, %v365
  %v367 = vpop.f32.mrf.mxu0
  %v368 = vadd.f32 %v90, %v367
  %369 = vmatprep.mubr.bf16.mxu0 0
  %370 = vmatmul.mubr.bf16.gmra.mxu0 %v157
  %v371 = vpop.f32.mrf.mxu0
  %v372 = vadd.f32 %v86, %v371
  %v373 = vpop.f32.mrf.mxu0
  %v374 = vadd.f32 %v90, %v373
  %v375 = vpop.f32.mrf.mxu0
  %v376 = vadd.f32 %v86, %v375
  %v377 = vpop.f32.mrf.mxu0
  %v378 = vadd.f32 %v90, %v377
  %379 = vmatprep.mubr.bf16.mxu0 0
  %380 = vmatmul.mubr.bf16.gmra.mxu0 %v158
  %v381 = vpop.f32.mrf.mxu0
  %v382 = vadd.f32 %v86, %v381
  %v383 = vpop.f32.mrf.mxu0
  %v384 = vadd.f32 %v90, %v383
  %v385 = vpop.f32.mrf.mxu0
  %v386 = vadd.f32 %v86, %v385
  %v387 = vpop.f32.mrf.mxu0
  %v388 = vadd.f32 %v90, %v387
  %389 = vmatprep.mubr.bf16.mxu0 0
  %390 = vmatmul.mubr.bf16.gmra.mxu0 %v159
  %v391 = vpop.f32.mrf.mxu0
  %v392 = vadd.f32 %v86, %v391
  %v393 = vpop.f32.mrf.mxu0
  %v394 = vadd.f32 %v90, %v393
  %v395 = vpop.f32.mrf.mxu0
  %v396 = vadd.f32 %v86, %v395
  %v397 = vpop.f32.mrf.mxu0
  %v398 = vadd.f32 %v90, %v397
  %399 = vmatprep.mubr.bf16.mxu0 0
  %400 = vmatmul.mubr.bf16.gmra.mxu0 %v160
  %v401 = vpop.f32.mrf.mxu0
  %v402 = vadd.f32 %v86, %v401
  %v403 = vpop.f32.mrf.mxu0
  %v404 = vadd.f32 %v90, %v403
  %v405 = vpop.f32.mrf.mxu0
  %v406 = vadd.f32 %v86, %v405
  %v407 = vpop.f32.mrf.mxu0
  %v408 = vadd.f32 %v90, %v407
  %409 = vmatprep.mubr.bf16.mxu0 0
  %410 = vmatmul.mubr.bf16.gmra.mxu0 %v161
  %v411 = vpop.f32.mrf.mxu0
  %v412 = vadd.f32 %v86, %v411
  %v413 = vpop.f32.mrf.mxu0
  %v414 = vadd.f32 %v90, %v413
  %v415 = vpop.f32.mrf.mxu0
  %v416 = vadd.f32 %v86, %v415
  %v417 = vpop.f32.mrf.mxu0
  %v418 = vadd.f32 %v90, %v417
  %419 = vmatprep.mubr.bf16.mxu0 0
  %420 = vmatmul.mubr.bf16.gmra.mxu0 %v162
  %v421 = vpop.f32.mrf.mxu0
  %v422 = vadd.f32 %v86, %v421
  %v423 = vpop.f32.mrf.mxu0
  %v424 = vadd.f32 %v90, %v423
  %v425 = vpop.f32.mrf.mxu0
  %v426 = vadd.f32 %v86, %v425
  %v427 = vpop.f32.mrf.mxu0
  %v428 = vadd.f32 %v90, %v427
  %429 = vdwg.mxu0
  %v430 = vxor.u32 %v294, 2147483648
  %v431 = vxor.u32 %v298, 2147483648
  %v432 = vxor.u32 %v304, 2147483648
  %v433 = vxor.u32 %v308, 2147483648
  %v434 = vxor.u32 %v314, 2147483648
  %v435 = vxor.u32 %v318, 2147483648
  %v436 = vxor.u32 %v324, 2147483648
  %v437 = vxor.u32 %v328, 2147483648
  %v438 = vxor.u32 %v334, 2147483648
  %v439 = vxor.u32 %v338, 2147483648
  %v440 = vxor.u32 %v344, 2147483648
  %v441 = vxor.u32 %v348, 2147483648
  %v442 = vxor.u32 %v354, 2147483648
  %v443 = vxor.u32 %v358, 2147483648
  %v444 = vxor.u32 %v364, 2147483648
  %v445 = vxor.u32 %v368, 2147483648
  %v446 = vxor.u32 %v374, 2147483648
  %v447 = vxor.u32 %v378, 2147483648
  %v448 = vxor.u32 %v384, 2147483648
  %v449 = vxor.u32 %v388, 2147483648
  %v450 = vxor.u32 %v394, 2147483648
  %v451 = vxor.u32 %v398, 2147483648
  %v452 = vxor.u32 %v404, 2147483648
  %v453 = vxor.u32 %v408, 2147483648
  %v454 = vxor.u32 %v414, 2147483648
  %v455 = vxor.u32 %v418, 2147483648
  %v456 = vxor.u32 %v424, 2147483648
  %v457 = vxor.u32 %v428, 2147483648
  %v458 = vmul.f32 %v430, 1.442695
  %v459 = vpow.pop %v458
  %v460 = vmul.f32 %v431, 1.442695
  %v461 = vpow.pop %v460
  %v462 = vmul.f32 %v432, 1.442695
  %v463 = vpow.pop %v462
  %v464 = vmul.f32 %v433, 1.442695
  %v465 = vpow.pop %v464
  %v466 = vmul.f32 %v434, 1.442695
  %v467 = vpow.pop %v466
  %v468 = vmul.f32 %v435, 1.442695
  %v469 = vpow.pop %v468
  %v470 = vmul.f32 %v436, 1.442695
  %v471 = vpow.pop %v470
  %v472 = vmul.f32 %v437, 1.442695
  %v473 = vpow.pop %v472
  %v474 = vmul.f32 %v438, 1.442695
  %v475 = vpow.pop %v474
  %v476 = vmul.f32 %v439, 1.442695
  %v477 = vpow.pop %v476
  %v478 = vmul.f32 %v440, 1.442695
  %v479 = vpow.pop %v478
  %v480 = vmul.f32 %v441, 1.442695
  %v481 = vpow.pop %v480
  %v482 = vmul.f32 %v442, 1.442695
  %v483 = vpow.pop %v482
  %v484 = vmul.f32 %v443, 1.442695
  %v485 = vpow.pop %v484
  %v486 = vmul.f32 %v444, 1.442695
  %v487 = vpow.pop %v486
  %v488 = vmul.f32 %v445, 1.442695
  %v489 = vpow.pop %v488
  %v490 = vmul.f32 %v446, 1.442695
  %v491 = vpow.pop %v490
  %v492 = vmul.f32 %v447, 1.442695
  %v493 = vpow.pop %v492
  %v494 = vmul.f32 %v448, 1.442695
  %v495 = vpow.pop %v494
  %v496 = vmul.f32 %v449, 1.442695
  %v497 = vpow.pop %v496
  %v498 = vmul.f32 %v450, 1.442695
  %v499 = vpow.pop %v498
  %v500 = vmul.f32 %v451, 1.442695
  %v501 = vpow.pop %v500
  %v502 = vmul.f32 %v452, 1.442695
  %v503 = vpow.pop %v502
  %v504 = vmul.f32 %v453, 1.442695
  %v505 = vpow.pop %v504
  %v506 = vmul.f32 %v454, 1.442695
  %v507 = vpow.pop %v506
  %v508 = vmul.f32 %v455, 1.442695
  %v509 = vpow.pop %v508
  %v510 = vmul.f32 %v456, 1.442695
  %v511 = vpow.pop %v510
  %v512 = vmul.f32 %v457, 1.442695
  %v513 = vpow.pop %v512
  %v514 = vadd.f32 %v459, 1.0
  %v515 = vadd.f32 %v461, 1.0
  %v516 = vadd.f32 %v463, 1.0
  %v517 = vadd.f32 %v465, 1.0
  %v518 = vadd.f32 %v467, 1.0
  %v519 = vadd.f32 %v469, 1.0
  %v520 = vadd.f32 %v471, 1.0
  %v521 = vadd.f32 %v473, 1.0
  %v522 = vadd.f32 %v475, 1.0
  %v523 = vadd.f32 %v477, 1.0
  %v524 = vadd.f32 %v479, 1.0
  %v525 = vadd.f32 %v481, 1.0
  %v526 = vadd.f32 %v483, 1.0
  %v527 = vadd.f32 %v485, 1.0
  %v528 = vadd.f32 %v487, 1.0
  %v529 = vadd.f32 %v489, 1.0
  %v530 = vadd.f32 %v491, 1.0
  %v531 = vadd.f32 %v493, 1.0
  %v532 = vadd.f32 %v495, 1.0
  %v533 = vadd.f32 %v497, 1.0
  %v534 = vadd.f32 %v499, 1.0
  %v535 = vadd.f32 %v501, 1.0
  %v536 = vadd.f32 %v503, 1.0
  %v537 = vadd.f32 %v505, 1.0
  %v538 = vadd.f32 %v507, 1.0
  %v539 = vadd.f32 %v509, 1.0
  %v540 = vadd.f32 %v511, 1.0
  %v541 = vadd.f32 %v513, 1.0
  %v542 = vrcp.pop %v514
  %v543 = vmul.f32 1.0, %v542
  %v544 = vrcp.pop %v515
  %v545 = vmul.f32 1.0, %v544
  %v546 = vrcp.pop %v516
  %v547 = vmul.f32 1.0, %v546
  %v548 = vrcp.pop %v517
  %v549 = vmul.f32 1.0, %v548
  %v550 = vrcp.pop %v518
  %v551 = vmul.f32 1.0, %v550
  %v552 = vrcp.pop %v519
  %v553 = vmul.f32 1.0, %v552
  %v554 = vrcp.pop %v520
  %v555 = vmul.f32 1.0, %v554
  %v556 = vrcp.pop %v521
  %v557 = vmul.f32 1.0, %v556
  %v558 = vrcp.pop %v522
  %v559 = vmul.f32 1.0, %v558
  %v560 = vrcp.pop %v523
  %v561 = vmul.f32 1.0, %v560
  %v562 = vrcp.pop %v524
  %v563 = vmul.f32 1.0, %v562
  %v564 = vrcp.pop %v525
  %v565 = vmul.f32 1.0, %v564
  %v566 = vrcp.pop %v526
  %v567 = vmul.f32 1.0, %v566
  %v568 = vrcp.pop %v527
  %v569 = vmul.f32 1.0, %v568
  %v570 = vrcp.pop %v528
  %v571 = vmul.f32 1.0, %v570
  %v572 = vrcp.pop %v529
  %v573 = vmul.f32 1.0, %v572
  %v574 = vrcp.pop %v530
  %v575 = vmul.f32 1.0, %v574
  %v576 = vrcp.pop %v531
  %v577 = vmul.f32 1.0, %v576
  %v578 = vrcp.pop %v532
  %v579 = vmul.f32 1.0, %v578
  %v580 = vrcp.pop %v533
  %v581 = vmul.f32 1.0, %v580
  %v582 = vrcp.pop %v534
  %v583 = vmul.f32 1.0, %v582
  %v584 = vrcp.pop %v535
  %v585 = vmul.f32 1.0, %v584
  %v586 = vrcp.pop %v536
  %v587 = vmul.f32 1.0, %v586
  %v588 = vrcp.pop %v537
  %v589 = vmul.f32 1.0, %v588
  %v590 = vrcp.pop %v538
  %v591 = vmul.f32 1.0, %v590
  %v592 = vrcp.pop %v539
  %v593 = vmul.f32 1.0, %v592
  %v594 = vrcp.pop %v540
  %v595 = vmul.f32 1.0, %v594
  %v596 = vrcp.pop %v541
  %v597 = vmul.f32 1.0, %v596
  %v598 = vmul.f32 %v292, %v543
  %v599 = vmul.f32 %v296, %v545
  %v600 = vmul.f32 %v302, %v547
  %v601 = vmul.f32 %v306, %v549
  %v602 = vmul.f32 %v312, %v551
  %v603 = vmul.f32 %v316, %v553
  %v604 = vmul.f32 %v322, %v555
  %v605 = vmul.f32 %v326, %v557
  %v606 = vmul.f32 %v332, %v559
  %v607 = vmul.f32 %v336, %v561
  %v608 = vmul.f32 %v342, %v563
  %v609 = vmul.f32 %v346, %v565
  %v610 = vmul.f32 %v352, %v567
  %v611 = vmul.f32 %v356, %v569
  %v612 = vmul.f32 %v362, %v571
  %v613 = vmul.f32 %v366, %v573
  %v614 = vmul.f32 %v372, %v575
  %v615 = vmul.f32 %v376, %v577
  %v616 = vmul.f32 %v382, %v579
  %v617 = vmul.f32 %v386, %v581
  %v618 = vmul.f32 %v392, %v583
  %v619 = vmul.f32 %v396, %v585
  %v620 = vmul.f32 %v402, %v587
  %v621 = vmul.f32 %v406, %v589
  %v622 = vmul.f32 %v412, %v591
  %v623 = vmul.f32 %v416, %v593
  %v624 = vmul.f32 %v422, %v595
  %v625 = vmul.f32 %v426, %v597
  %s626 = sadd.s32 0, 0
  %s627 = smul.u32 %s626, 112
  %v628 = vlaneseq
  %v629 = vshrl.u32 %v628, 7
  %v630 = vadd.s32 %v629, 8
  %v631 = vadd.s32 %v629, 16
  %v632 = vadd.s32 %v629, 24
  %v633 = vadd.s32 %v629, 32
  %v634 = vadd.s32 %v629, 40
  %v635 = vadd.s32 %v629, 48
  %v636 = vadd.s32 %v629, 56
  %v637 = vadd.s32 %v629, 64
  %v638 = vadd.s32 %v629, 72
  %v639 = vadd.s32 %v629, 80
  %v640 = vadd.s32 %v629, 88
  %v641 = vadd.s32 %v629, 96
  %v642 = vadd.s32 %v629, 104
  %v643 = vstv %s627
  %v644 = vadd.s32 %v629, %v643
  %v645 = vadd.s32 %v630, %v643
  %v646 = vadd.s32 %v631, %v643
  %v647 = vadd.s32 %v632, %v643
  %v648 = vadd.s32 %v633, %v643
  %v649 = vadd.s32 %v634, %v643
  %v650 = vadd.s32 %v635, %v643
  %v651 = vadd.s32 %v636, %v643
  %v652 = vadd.s32 %v637, %v643
  %v653 = vadd.s32 %v638, %v643
  %v654 = vadd.s32 %v639, %v643
  %v655 = vadd.s32 %v640, %v643
  %v656 = vadd.s32 %v641, %v643
  %v657 = vadd.s32 %v642, %v643
  %vm658 = vcmp.lt.s32.totalorder %v644, 100
  %vm659 = vcmp.lt.s32.totalorder %v645, 100
  %vm660 = vcmp.lt.s32.totalorder %v646, 100
  %vm661 = vcmp.lt.s32.totalorder %v647, 100
  %vm662 = vcmp.lt.s32.totalorder %v648, 100
  %vm663 = vcmp.lt.s32.totalorder %v649, 100
  %vm664 = vcmp.lt.s32.totalorder %v650, 100
  %vm665 = vcmp.lt.s32.totalorder %v651, 100
  %vm666 = vcmp.lt.s32.totalorder %v652, 100
  %vm667 = vcmp.lt.s32.totalorder %v653, 100
  %vm668 = vcmp.lt.s32.totalorder %v654, 100
  %vm669 = vcmp.lt.s32.totalorder %v655, 100
  %vm670 = vcmp.lt.s32.totalorder %v656, 100
  %vm671 = vcmp.lt.s32.totalorder %v657, 100
  %v672 = vsel %vm658, 1, 0
  %v673 = vsel %vm659, 1, 0
  %v674 = vsel %vm660, 1, 0
  %v675 = vsel %vm661, 1, 0
  %v676 = vsel %vm662, 1, 0
  %v677 = vsel %vm663, 1, 0
  %v678 = vsel %vm664, 1, 0
  %v679 = vsel %vm665, 1, 0
  %v680 = vsel %vm666, 1, 0
  %v681 = vsel %vm667, 1, 0
  %v682 = vsel %vm668, 1, 0
  %v683 = vsel %vm669, 1, 0
  %v684 = vsel %vm670, 1, 0
  %v685 = vsel %vm671, 1, 0
  %vm686 = vcmp.eq.s32.totalorder %v672, 1
  %vm687 = vcmp.eq.s32.totalorder %v673, 1
  %vm688 = vcmp.eq.s32.totalorder %v674, 1
  %vm689 = vcmp.eq.s32.totalorder %v675, 1
  %vm690 = vcmp.eq.s32.totalorder %v676, 1
  %vm691 = vcmp.eq.s32.totalorder %v677, 1
  %vm692 = vcmp.eq.s32.totalorder %v678, 1
  %vm693 = vcmp.eq.s32.totalorder %v679, 1
  %vm694 = vcmp.eq.s32.totalorder %v680, 1
  %vm695 = vcmp.eq.s32.totalorder %v681, 1
  %vm696 = vcmp.eq.s32.totalorder %v682, 1
  %vm697 = vcmp.eq.s32.totalorder %v683, 1
  %vm698 = vcmp.eq.s32.totalorder %v684, 1
  %vm699 = vcmp.eq.s32.totalorder %v685, 1
  %v700 = vsel %vm686, %v598, -inf
  %v701 = vsel %vm687, %v599, -inf
  %v702 = vsel %vm688, %v600, -inf
  %v703 = vsel %vm689, %v601, -inf
  %v704 = vsel %vm690, %v602, -inf
  %v705 = vsel %vm691, %v603, -inf
  %v706 = vsel %vm692, %v604, -inf
  %v707 = vsel %vm693, %v605, -inf
  %v708 = vsel %vm694, %v606, -inf
  %v709 = vsel %vm695, %v607, -inf
  %v710 = vsel %vm696, %v608, -inf
  %v711 = vsel %vm697, %v609, -inf
  %v712 = vsel %vm698, %v610, -inf
  %v713 = vsel %vm699, %v611, -inf
  %v714 = vsel %vm686, %v612, -inf
  %v715 = vsel %vm687, %v613, -inf
  %v716 = vsel %vm688, %v614, -inf
  %v717 = vsel %vm689, %v615, -inf
  %v718 = vsel %vm690, %v616, -inf
  %v719 = vsel %vm691, %v617, -inf
  %v720 = vsel %vm692, %v618, -inf
  %v721 = vsel %vm693, %v619, -inf
  %v722 = vsel %vm694, %v620, -inf
  %v723 = vsel %vm695, %v621, -inf
  %v724 = vsel %vm696, %v622, -inf
  %v725 = vsel %vm697, %v623, -inf
  %v726 = vsel %vm698, %v624, -inf
  %v727 = vsel %vm699, %v625, -inf
  %v728 = vmax.f32 %v700, %v702
  %v729 = vmax.f32 %v701, %v703
  %v730 = vmax.f32 %v728, %v704
  %v731 = vmax.f32 %v729, %v705
  %v732 = vmax.f32 %v730, %v706
  %v733 = vmax.f32 %v731, %v707
  %v734 = vmax.f32 %v732, %v708
  %v735 = vmax.f32 %v733, %v709
  %v736 = vmax.f32 %v734, %v710
  %v737 = vmax.f32 %v735, %v711
  %v738 = vmax.f32 %v736, %v712
  %v739 = vmax.f32 %v737, %v713
  %v740 = vmax.f32 %v738, %v739
  %v741 = vrot.slane %v740, 4
  %v742 = vmax.f32 %v740, %v741
  %v743 = vrot.slane %v742, 2
  %v744 = vmax.f32 %v742, %v743
  %v745 = vrot.slane %v744, 1
  %v746 = vmax.f32 %v744, %v745
  %v747 = vmax.f32 %v714, %v716
  %v748 = vmax.f32 %v715, %v717
  %v749 = vmax.f32 %v747, %v718
  %v750 = vmax.f32 %v748, %v719
  %v751 = vmax.f32 %v749, %v720
  %v752 = vmax.f32 %v750, %v721
  %v753 = vmax.f32 %v751, %v722
  %v754 = vmax.f32 %v752, %v723
  %v755 = vmax.f32 %v753, %v724
  %v756 = vmax.f32 %v754, %v725
  %v757 = vmax.f32 %v755, %v726
  %v758 = vmax.f32 %v756, %v727
  %v759 = vmax.f32 %v757, %v758
  %v760 = vrot.slane %v759, 4
  %v761 = vmax.f32 %v759, %v760
  %v762 = vrot.slane %v761, 2
  %v763 = vmax.f32 %v761, %v762
  %v764 = vrot.slane %v763, 1
  %v765 = vmax.f32 %v763, %v764
  %p766 = scmp.eq.s32.totalorder 0, 0
  // Predicated region
  $region14: #{malconv_forward.1} parent=0 // pred_check
    %p767 = pneg %p766
  $region15: #{malconv_forward.1} parent=0 // pred_check_branch
    %769 = sbr.rel (%p767) target = $region17
  $region16: #{malconv_forward.1} parent=0 // pred_region
    %770 = vst [vmem:[%s3] sm:$0x3] -inf
  $region17: #{malconv_forward.1} parent=0 // pred_fallthru
    _
  %v771 = vld [vmem:[%s3] sm:$0x3]
  %vm774 = vcmask 1041409
  %v775 = vsel %vm774, %v765, %v746
  %v777 = vmax.f32 %v771, %v775
  %778 = vst [vmem:[%s3] sm:$0x3] %v777
  // Predicated region
  $region18: #{malconv_forward.1} parent=0 // pred_check
    _
  $region19: #{malconv_forward.1} parent=0 // pred_check_branch
    %780 = sbr.rel (0) target = $region21
  $region20: #{malconv_forward.1} parent=0 // pred_region
    _
  $region21: #{malconv_forward.1} parent=0 // pred_fallthru
    _
  // Predicated region
  $region22: #{malconv_forward.1} parent=0 // pred_check
    _
  $region23: #{malconv_forward.1} parent=0 // pred_check_branch
    %782 = sbr.rel (0) target = $region25
  $region24: #{malconv_forward.1} parent=0 // pred_region
    _
  $region25: #{malconv_forward.1} parent=0 // pred_fallthru
    _

</llo_original>
